<compile_context>
chip_gen: v7x
topology: tpu7x:2x2x1
jax: 0.10.0
libtpu: 0.0.40
codegen_flags: <defaults>
</compile_context>

<pallas_src>
import jax
import jax.numpy as jnp
from jax.experimental import pallas as pl
from jax.experimental.pallas import tpu as pltpu


LANES = 128
MAX_ROWS_PER_BLOCK = 2048            # 4 MiB x-slab + 1 MiB out-slab per step (f32)
MAX_LANES_PER_BLOCK = 512 * LANES    # ragged-path lane block
SINGLE_STEP_MAX_BYTES = 2 * 1024 * 1024   # below this, run the whole thing in 1 step


def _silu_channelmix_kernel(wb_ref, x_ref, o_ref):
    # wb_ref: SMEM (C+1,) f32 -> [w_0 .. w_{C-1}, bias]
    # x_ref : VMEM (BN, C, TR, 128) in the input's native dtype
    # o_ref : VMEM (BN, TR, 128) f32
    BN, C = x_ref.shape[0], x_ref.shape[1]
    for n in range(BN):                       # BN, C tiny & static -> unrolled VPU FMAs
        acc = x_ref[n, 0].astype(jnp.float32) * wb_ref[0]
        for c in range(1, C):
            acc = acc + x_ref[n, c].astype(jnp.float32) * wb_ref[c]
        acc = acc + wb_ref[C]                 # bias
        o_ref[n] = (acc * jax.nn.sigmoid(acc)).astype(o_ref.dtype)   # SiLU


def _silu_channelmix_kernel_ragged(wb_ref, x_ref, o_ref):
    # Fallback when D*H*W is not a multiple of 128 (no pad pass; Pallas masks
    # the partial lane block).  x_ref: VMEM (C, TS); o_ref: VMEM (1, TS).
    C = x_ref.shape[0]
    acc = x_ref[0:1, :].astype(jnp.float32) * wb_ref[0]
    for c in range(1, C):
        acc = acc + x_ref[c:c + 1, :].astype(jnp.float32) * wb_ref[c]
    acc = acc + wb_ref[C]
    o_ref[...] = (acc * jax.nn.sigmoid(acc)).astype(o_ref.dtype)


def model_forward(x, weight, bias):
    """Equivalent of: v1 = ConvTranspose3d(4,1,1,stride=1,padding=1)(x); v1*sigmoid(v1)."""
    N, C, D, H, W = x.shape
    assert weight.shape[0] == C and weight.shape[1] == 1
    S = D * H * W

    # weights + bias packed as SMEM scalars: [w_0 .. w_{C-1}, b]
    wb = jnp.concatenate([weight.reshape(C).astype(jnp.float32),
                          bias.reshape(1).astype(jnp.float32)])

    compiler_params = pltpu.CompilerParams(
        dimension_semantics=("parallel", "parallel"))

    if S % LANES == 0:
        # Dense lane-major path: free reshape, native dtype (no pad / no astype pass).
        R = S // LANES
        x4 = x.reshape(N, C, R, LANES)
        x_bytes = x.size * x.dtype.itemsize

        if x_bytes <= SINGLE_STEP_MAX_BYTES:
            bn, tr = N, R                     # whole problem in a single grid step
        else:
            bn = 1
            tr = min(R, MAX_ROWS_PER_BLOCK)   # multiple of 8 or full R -> legal
            if N == 1 and tr == R:            # v7x: keep >= 2 parallel steps (2 TCs)
                tr = max(8, ((pl.cdiv(R, 2) + 7) // 8) * 8)
        num_n = pl.cdiv(N, bn)
        num_r = pl.cdiv(R, tr)

        out = pl.pallas_call(
            _silu_channelmix_kernel,
            out_shape=jax.ShapeDtypeStruct((N, R, LANES), jnp.float32),
            grid_spec=pltpu.PrefetchScalarGridSpec(
                num_scalar_prefetch=0,
                grid=(num_n, num_r),
                in_specs=[
                    pl.BlockSpec(memory_space=pltpu.MemorySpace.SMEM),   # w + b scalars
                    pl.BlockSpec((bn, C, tr, LANES), lambda n, r: (n, 0, r, 0)),
                ],
                out_specs=pl.BlockSpec((bn, tr, LANES), lambda n, r: (n, r, 0)),
            ),
            compiler_params=compiler_params,
        )(wb, x4)
        v = out.reshape(N, D, H, W)
    else:
        # Ragged tail: (N, C, S) view, lane-aligned blocks, partial block masked.
        x3 = x.reshape(N, C, S)
        ts = S if S <= MAX_LANES_PER_BLOCK else MAX_LANES_PER_BLOCK
        num_s = pl.cdiv(S, ts)

        out = pl.pallas_call(
            _silu_channelmix_kernel_ragged,
            out_shape=jax.ShapeDtypeStruct((N, 1, S), jnp.float32),
            grid_spec=pltpu.PrefetchScalarGridSpec(
                num_scalar_prefetch=0,
                grid=(N, num_s),
                in_specs=[
                    pl.BlockSpec(memory_space=pltpu.MemorySpace.SMEM),
                    pl.BlockSpec((None, C, ts), lambda n, s: (n, 0, s)),
                ],
                out_specs=pl.BlockSpec((None, 1, ts), lambda n, s: (n, 0, s)),
            ),
            compiler_params=compiler_params,
        )(wb, x3)
        v = out.reshape(N, D, H, W)

    # TODO(synk): optional D-border over-read trim (skip first/last H*W plane) left out;
    # it only saves D/(D-2)x input bytes and complicates the index_map.
    return v[:, None, 1:-1, 1:-1, 1:-1]


def reference_forward(x, weight, bias):
    xc = x[:, :, 1:-1, 1:-1, 1:-1].astype(jnp.float32)
    w = weight.reshape(weight.shape[0]).astype(jnp.float32)      # (C,)
    v1 = jnp.einsum("ncdhw,c->ndhw", xc, w)[:, None] + bias.reshape(1, 1, 1, 1, 1)
    return v1 * jax.nn.sigmoid(v1)


if __name__ == "__main__":
    key = jax.random.PRNGKey(0)
    kx, kw, kb = jax.random.split(key, 3)

    # Shapes consistent with ConvTranspose3d(4, 1, 1, stride=1, padding=1):
    # input (N=2, C=4, D=H=W=8) -> output (2, 1, 6, 6, 6)
    N, C, D, H, W = 2, 4, 8, 8, 8
    x = jax.random.normal(kx, (N, C, D, H, W), dtype=jnp.float32)

    # Deterministic parameter init (PyTorch shapes: weight (in=4, out=1, 1,1,1), bias (1,))
    fan = C * 1 * 1 * 1
    bound = 1.0 / (fan ** 0.5)
    weight = jax.random.uniform(kw, (C, 1, 1, 1, 1), jnp.float32, -bound, bound)
    bias = jax.random.uniform(kb, (1,), jnp.float32, -bound, bound)

    out = jax.block_until_ready(model_forward(x, weight, bias))
    ref = reference_forward(x, weight, bias)

    assert out.shape == (N, 1, D - 2, H - 2, W - 2)
    assert jnp.allclose(out, ref, atol=1e-5, rtol=1e-5)

    print("KERNEL_OK")
</pallas_src>

<mosaic_0001>
module attributes {stable_mosaic.version = 11 : i64} {
  func.func @_silu_channelmix_kernel(%arg0: i32, %arg1: i32, %arg2: memref<5xf32, #tpu.memory_space<smem>>, %arg3: memref<2x4x4x128xf32, #tpu.memory_space<vmem>>, %arg4: memref<2x4x128xf32, #tpu.memory_space<vmem>>) attributes {dimension_semantics = [#tpu.dimension_semantics<parallel>, #tpu.dimension_semantics<parallel>], iteration_bounds = array<i64: 1, 1>, scalar_prefetch = 0 : i64, scratch_operands = 0 : i64, tpu.core_type = #tpu.core_type<tc>, window_params = [{transform_indices = @transform_0, window_bounds = array<i64: 5>}, {transform_indices = @transform_1, window_bounds = array<i64: 2, 4, 4, 128>}, {transform_indices = @transform_2, window_bounds = array<i64: 2, 4, 128>}]} {
    %c0 = arith.constant 0 : index
    %c0_0 = arith.constant 0 : index
    %c0_1 = arith.constant 0 : index
    %c0_2 = arith.constant 0 : index
    %0 = vector.load %arg3[%c0, %c0_0, %c0_1, %c0_2] : memref<2x4x4x128xf32, #tpu.memory_space<vmem>>, vector<1x1x4x128xf32>
    %1 = vector.shape_cast %0 : vector<1x1x4x128xf32> to vector<4x128xf32>
    %c0_3 = arith.constant 0 : index
    %2 = memref.load %arg2[%c0_3] : memref<5xf32, #tpu.memory_space<smem>>
    %3 = vector.broadcast %2 : f32 to vector<4x128xf32>
    %4 = arith.mulf %1, %3 : vector<4x128xf32>
    %c0_4 = arith.constant 0 : index
    %c1 = arith.constant 1 : index
    %c0_5 = arith.constant 0 : index
    %c0_6 = arith.constant 0 : index
    %5 = vector.load %arg3[%c0_4, %c1, %c0_5, %c0_6] : memref<2x4x4x128xf32, #tpu.memory_space<vmem>>, vector<1x1x4x128xf32>
    %6 = vector.shape_cast %5 : vector<1x1x4x128xf32> to vector<4x128xf32>
    %c1_7 = arith.constant 1 : index
    %7 = memref.load %arg2[%c1_7] : memref<5xf32, #tpu.memory_space<smem>>
    %8 = vector.broadcast %7 : f32 to vector<4x128xf32>
    %9 = arith.mulf %6, %8 : vector<4x128xf32>
    %10 = arith.addf %4, %9 : vector<4x128xf32>
    %c0_8 = arith.constant 0 : index
    %c2 = arith.constant 2 : index
    %c0_9 = arith.constant 0 : index
    %c0_10 = arith.constant 0 : index
    %11 = vector.load %arg3[%c0_8, %c2, %c0_9, %c0_10] : memref<2x4x4x128xf32, #tpu.memory_space<vmem>>, vector<1x1x4x128xf32>
    %12 = vector.shape_cast %11 : vector<1x1x4x128xf32> to vector<4x128xf32>
    %c2_11 = arith.constant 2 : index
    %13 = memref.load %arg2[%c2_11] : memref<5xf32, #tpu.memory_space<smem>>
    %14 = vector.broadcast %13 : f32 to vector<4x128xf32>
    %15 = arith.mulf %12, %14 : vector<4x128xf32>
    %16 = arith.addf %10, %15 : vector<4x128xf32>
    %c0_12 = arith.constant 0 : index
    %c3 = arith.constant 3 : index
    %c0_13 = arith.constant 0 : index
    %c0_14 = arith.constant 0 : index
    %17 = vector.load %arg3[%c0_12, %c3, %c0_13, %c0_14] : memref<2x4x4x128xf32, #tpu.memory_space<vmem>>, vector<1x1x4x128xf32>
    %18 = vector.shape_cast %17 : vector<1x1x4x128xf32> to vector<4x128xf32>
    %c3_15 = arith.constant 3 : index
    %19 = memref.load %arg2[%c3_15] : memref<5xf32, #tpu.memory_space<smem>>
    %20 = vector.broadcast %19 : f32 to vector<4x128xf32>
    %21 = arith.mulf %18, %20 : vector<4x128xf32>
    %22 = arith.addf %16, %21 : vector<4x128xf32>
    %c4 = arith.constant 4 : index
    %23 = memref.load %arg2[%c4] : memref<5xf32, #tpu.memory_space<smem>>
    %24 = vector.broadcast %23 : f32 to vector<4x128xf32>
    %25 = arith.addf %22, %24 : vector<4x128xf32>
    %26 = arith.negf %25 : vector<4x128xf32>
    %27 = math.exp %26 : vector<4x128xf32>
    %cst = arith.constant 1.000000e+00 : f32
    %28 = vector.broadcast %cst : f32 to vector<4x128xf32>
    %29 = arith.addf %28, %27 : vector<4x128xf32>
    %30 = arith.divf %28, %29 : vector<4x128xf32>
    %31 = arith.mulf %25, %30 : vector<4x128xf32>
    %c0_16 = arith.constant 0 : index
    %c0_17 = arith.constant 0 : index
    %c0_18 = arith.constant 0 : index
    %32 = vector.load %arg4[%c0_16, %c0_17, %c0_18] : memref<2x4x128xf32, #tpu.memory_space<vmem>>, vector<1x4x128xf32>
    %33 = vector.shape_cast %32 : vector<1x4x128xf32> to vector<4x128xf32>
    %34 = vector.shape_cast %31 : vector<4x128xf32> to vector<1x4x128xf32>
    tpu.vector_store %arg4[%c0_16, %c0_17, %c0_18], %34 {strides = array<i32>} : memref<2x4x128xf32, #tpu.memory_space<vmem>>, vector<1x4x128xf32>,
    %c1_19 = arith.constant 1 : index
    %c0_20 = arith.constant 0 : index
    %c0_21 = arith.constant 0 : index
    %c0_22 = arith.constant 0 : index
    %35 = vector.load %arg3[%c1_19, %c0_20, %c0_21, %c0_22] : memref<2x4x4x128xf32, #tpu.memory_space<vmem>>, vector<1x1x4x128xf32>
    %36 = vector.shape_cast %35 : vector<1x1x4x128xf32> to vector<4x128xf32>
    %c0_23 = arith.constant 0 : index
    %37 = memref.load %arg2[%c0_23] : memref<5xf32, #tpu.memory_space<smem>>
    %38 = vector.broadcast %37 : f32 to vector<4x128xf32>
    %39 = arith.mulf %36, %38 : vector<4x128xf32>
    %c1_24 = arith.constant 1 : index
    %c1_25 = arith.constant 1 : index
    %c0_26 = arith.constant 0 : index
    %c0_27 = arith.constant 0 : index
    %40 = vector.load %arg3[%c1_24, %c1_25, %c0_26, %c0_27] : memref<2x4x4x128xf32, #tpu.memory_space<vmem>>, vector<1x1x4x128xf32>
    %41 = vector.shape_cast %40 : vector<1x1x4x128xf32> to vector<4x128xf32>
    %c1_28 = arith.constant 1 : index
    %42 = memref.load %arg2[%c1_28] : memref<5xf32, #tpu.memory_space<smem>>
    %43 = vector.broadcast %42 : f32 to vector<4x128xf32>
    %44 = arith.mulf %41, %43 : vector<4x128xf32>
    %45 = arith.addf %39, %44 : vector<4x128xf32>
    %c1_29 = arith.constant 1 : index
    %c2_30 = arith.constant 2 : index
    %c0_31 = arith.constant 0 : index
    %c0_32 = arith.constant 0 : index
    %46 = vector.load %arg3[%c1_29, %c2_30, %c0_31, %c0_32] : memref<2x4x4x128xf32, #tpu.memory_space<vmem>>, vector<1x1x4x128xf32>
    %47 = vector.shape_cast %46 : vector<1x1x4x128xf32> to vector<4x128xf32>
    %c2_33 = arith.constant 2 : index
    %48 = memref.load %arg2[%c2_33] : memref<5xf32, #tpu.memory_space<smem>>
    %49 = vector.broadcast %48 : f32 to vector<4x128xf32>
    %50 = arith.mulf %47, %49 : vector<4x128xf32>
    %51 = arith.addf %45, %50 : vector<4x128xf32>
    %c1_34 = arith.constant 1 : index
    %c3_35 = arith.constant 3 : index
    %c0_36 = arith.constant 0 : index
    %c0_37 = arith.constant 0 : index
    %52 = vector.load %arg3[%c1_34, %c3_35, %c0_36, %c0_37] : memref<2x4x4x128xf32, #tpu.memory_space<vmem>>, vector<1x1x4x128xf32>
    %53 = vector.shape_cast %52 : vector<1x1x4x128xf32> to vector<4x128xf32>
    %c3_38 = arith.constant 3 : index
    %54 = memref.load %arg2[%c3_38] : memref<5xf32, #tpu.memory_space<smem>>
    %55 = vector.broadcast %54 : f32 to vector<4x128xf32>
    %56 = arith.mulf %53, %55 : vector<4x128xf32>
    %57 = arith.addf %51, %56 : vector<4x128xf32>
    %c4_39 = arith.constant 4 : index
    %58 = memref.load %arg2[%c4_39] : memref<5xf32, #tpu.memory_space<smem>>
    %59 = vector.broadcast %58 : f32 to vector<4x128xf32>
    %60 = arith.addf %57, %59 : vector<4x128xf32>
    %61 = arith.negf %60 : vector<4x128xf32>
    %62 = math.exp %61 : vector<4x128xf32>
    %cst_40 = arith.constant 1.000000e+00 : f32
    %63 = vector.broadcast %cst_40 : f32 to vector<4x128xf32>
    %64 = arith.addf %63, %62 : vector<4x128xf32>
    %65 = arith.divf %63, %64 : vector<4x128xf32>
    %66 = arith.mulf %60, %65 : vector<4x128xf32>
    %c1_41 = arith.constant 1 : index
    %c0_42 = arith.constant 0 : index
    %c0_43 = arith.constant 0 : index
    %67 = vector.load %arg4[%c1_41, %c0_42, %c0_43] : memref<2x4x128xf32, #tpu.memory_space<vmem>>, vector<1x4x128xf32>
    %68 = vector.shape_cast %67 : vector<1x4x128xf32> to vector<4x128xf32>
    %69 = vector.shape_cast %66 : vector<4x128xf32> to vector<1x4x128xf32>
    tpu.vector_store %arg4[%c1_41, %c0_42, %c0_43], %69 {strides = array<i32>} : memref<2x4x128xf32, #tpu.memory_space<vmem>>, vector<1x4x128xf32>,
    return
  }
  func.func @transform_0(%arg0: i32, %arg1: i32) -> i32 {
    %c0_i32 = arith.constant 0 : i32
    %c0_i32_0 = arith.constant 0 : i32
    return %c0_i32 : i32
  }
  func.func @transform_1(%arg0: i32, %arg1: i32) -> (i32, i32, i32, i32) {
    %c0_i32 = arith.constant 0 : i32
    %c0_i32_0 = arith.constant 0 : i32
    %c0_i32_1 = arith.constant 0 : i32
    return %arg0, %c0_i32, %arg1, %c0_i32_0 : i32, i32, i32, i32
  }
  func.func @transform_2(%arg0: i32, %arg1: i32) -> (i32, i32, i32) {
    %c0_i32 = arith.constant 0 : i32
    %c0_i32_0 = arith.constant 0 : i32
    return %arg0, %arg1, %c0_i32 : i32, i32, i32
  }
}

</mosaic_0001>

<llo_original>
// kernel: tpu_custom_call.1
$region0: #{tpu_custom_call.1}
  #allocation0 [shape = 'u32[]', space=smem, size = 0x4, offset = 0x4, fixed_abs, tag = 'smem constant byte address 0x4 - core index']
  #allocation1 [shape = 'u32[144,128]{1,0:T(1,128)}', space=vmem, size = 0x12000, scoped, tag = 'internal scratch']
  %s0 = inlined_call_operand.hbm [shape: f32[5], index: 0, kind: input, shape index: {}]
  %s1 = inlined_call_operand.hbm [shape: f32[2,4,4,128], index: 1, kind: input, shape index: {}]
  %s2 = inlined_call_operand.hbm [shape: f32[2,4,128], index: 2, kind: output, shape index: {}]
  %s3 = sld [smem:[#allocation0]]
  $region26: #{tpu_custom_call.1} parent=0
    _
  %s5 = ssub.s32 1, %s3
  %s6 = scalar_select 0, %s5, %s3
  $region1: #{tpu_custom_call.1} parent=0
    #allocation2 [shape = 'u8[512]{0}', space=smem, size = 0x200, scoped, tag = 'input window, operand 0, single buffered']
    #allocation3 [shape = 's32[1]{0}', space=sflag, size = 0x4, scoped, tag = 'scoped memory for tpu_custom_call.1']
    #allocation4 [shape = 's32[1]{0}', space=sflag, size = 0x4, scoped, tag = 'scoped memory for tpu_custom_call.1']
    #allocation5 [shape = 's32[1]{0}', space=sflag, size = 0x4, scoped, tag = 'scoped memory for tpu_custom_call.1']
    #allocation6 [shape = 'u8[16384]{0}', space=vmem, size = 0x4000, scoped, tag = 'input window, operand 1, single buffered']
    #allocation7 [shape = 'u8[4096]{0}', space=vmem, size = 0x1000, scoped, tag = 'output window, operand 0, single buffered']
    %7 = vsyncpa [#allocation5], 0
    %8 = vsyncpa [#allocation3], 0
    %9 = vsyncpa [#allocation4], 0
    // Predicated region
    $region2: #{tpu_custom_call.1} parent=1 // pred_check
      _
    $region3: #{tpu_custom_call.1} parent=1 // pred_check_branch
      %11 = sbr.rel (0) target = $region5
    $region4: #{tpu_custom_call.1} parent=1 // pred_region
      %s13 = ssub.s32 16, 16
      %14 = vsyncadd [#allocation5], %s13
      %17 = dma.hbm_to_smem %s0, 16, [#allocation2], [#allocation5]
    $region5: #{tpu_custom_call.1} parent=1 // pred_fallthru
      _
    // Predicated region
    $region6: #{tpu_custom_call.1} parent=1 // pred_check
      _
    $region7: #{tpu_custom_call.1} parent=1 // pred_check_branch
      %19 = sbr.rel (0) target = $region9
    $region8: #{tpu_custom_call.1} parent=1 // pred_region
      %s21 = ssub.s32 512, 512
      %22 = vsyncadd [#allocation3], %s21
      %s23 = sshll.u32 [#allocation6], 4
      %s24 = int_to_ptr.vmem [resolvable:$true] %s23
      %29 = dma.hbm_to_vmem [thread:$0]  %s1, 512, %s24, [#allocation3], 64, 64, 4
    $region9: #{tpu_custom_call.1} parent=1 // pred_fallthru
      _
    // Predicated region
    $region10: #{tpu_custom_call.1} parent=1 // pred_check
      _
    $region11: #{tpu_custom_call.1} parent=1 // pred_check_branch
      %31 = sbr.rel (0) target = $region13
    $region12: #{tpu_custom_call.1} parent=1 // pred_region
      %32 = dma.done [#allocation5], 16
    $region13: #{tpu_custom_call.1} parent=1 // pred_fallthru
      _
    // Predicated region
    $region14: #{tpu_custom_call.1} parent=1 // pred_check
      _
    $region15: #{tpu_custom_call.1} parent=1 // pred_check_branch
      %34 = sbr.rel (0) target = $region17
    $region16: #{tpu_custom_call.1} parent=1 // pred_region
      %35 = dma.done [#allocation3], 512
    $region17: #{tpu_custom_call.1} parent=1 // pred_fallthru
      _
    %36 = sfence
    %v37 = vld [vmem:[#allocation6] sm:$0xf]
    %s38 = sld [smem:[#allocation2]]
    %v39 = vstv %s38
    %v40 = vmul.f32 %v37, %v39
    %s41 = scalar_lea.vmem [#allocation6], 4
    %v42 = vld [vmem:[%s41] sm:$0xf]
    %s43 = sld [smem:[#allocation2 + $0x1]]
    %v44 = vstv %s43
    %v45 = vmul.f32 %v42, %v44
    %v46 = vadd.f32 %v40, %v45
    %s47 = scalar_lea.vmem [#allocation6], 8
    %v48 = vld [vmem:[%s47] sm:$0xf]
    %s49 = sld [smem:[#allocation2 + $0x2]]
    %v50 = vstv %s49
    %v51 = vmul.f32 %v48, %v50
    %v52 = vadd.f32 %v46, %v51
    %s53 = scalar_lea.vmem [#allocation6], 12
    %v54 = vld [vmem:[%s53] sm:$0xf]
    %s55 = sld [smem:[#allocation2 + $0x3]]
    %v56 = vstv %s55
    %v57 = vmul.f32 %v54, %v56
    %v58 = vadd.f32 %v52, %v57
    %s59 = sld [smem:[#allocation2 + $0x4]]
    %v60 = vstv %s59
    %v61 = vadd.f32 %v58, %v60
    %v62 = vxor.u32 %v61, 2147483648
    %v63 = vmul.f32 %v62, 1.442695
    %v64 = vpow.pop %v63
    %v65 = vadd.f32 %v64, 1.0
    %v66 = vrcp.pop %v65
    %v67 = vmul.f32 1.0, %v66
    %v68 = vmul.f32 %v61, %v67
    %69 = vst [vmem:[#allocation7] sm:$0xf] %v68
    %s70 = scalar_lea.vmem [#allocation6], 16
    %v71 = vld [vmem:[%s70] sm:$0xf]
    %s72 = sld [smem:[#allocation2]]
    %v73 = vstv %s72
    %v74 = vmul.f32 %v71, %v73
    %s75 = scalar_lea.vmem [#allocation6], 20
    %v76 = vld [vmem:[%s75] sm:$0xf]
    %s77 = sld [smem:[#allocation2 + $0x1]]
    %v78 = vstv %s77
    %v79 = vmul.f32 %v76, %v78
    %v80 = vadd.f32 %v74, %v79
    %s81 = scalar_lea.vmem [#allocation6], 24
    %v82 = vld [vmem:[%s81] sm:$0xf]
    %s83 = sld [smem:[#allocation2 + $0x2]]
    %v84 = vstv %s83
    %v85 = vmul.f32 %v82, %v84
    %v86 = vadd.f32 %v80, %v85
    %s87 = scalar_lea.vmem [#allocation6], 28
    %v88 = vld [vmem:[%s87] sm:$0xf]
    %s89 = sld [smem:[#allocation2 + $0x3]]
    %v90 = vstv %s89
    %v91 = vmul.f32 %v88, %v90
    %v92 = vadd.f32 %v86, %v91
    %s93 = sld [smem:[#allocation2 + $0x4]]
    %v94 = vstv %s93
    %v95 = vadd.f32 %v92, %v94
    %v96 = vxor.u32 %v95, 2147483648
    %v97 = vmul.f32 %v96, 1.442695
    %v98 = vpow.pop %v97
    %v99 = vadd.f32 %v98, 1.0
    %v100 = vrcp.pop %v99
    %v101 = vmul.f32 1.0, %v100
    %v102 = vmul.f32 %v95, %v101
    %s103 = scalar_lea.vmem [#allocation7], 4
    %104 = vst [vmem:[%s103] sm:$0xf] %v102
    // Predicated region
    $region18: #{tpu_custom_call.1} parent=1 // pred_check
      _
    $region19: #{tpu_custom_call.1} parent=1 // pred_check_branch
      %106 = sbr.rel (0) target = $region21
    $region20: #{tpu_custom_call.1} parent=1 // pred_region
      %s108 = ssub.s32 128, 128
      %109 = vsyncadd [#allocation4], %s108
      %s110 = sshll.u32 [#allocation7], 4
      %s111 = int_to_ptr.vmem [resolvable:$true] %s110
      %116 = dma.vmem_to_hbm [thread:$0]  %s111, 128, %s2, [#allocation4], 64, 64, 4
    $region21: #{tpu_custom_call.1} parent=1 // pred_fallthru
      _
    // Predicated region
    $region22: #{tpu_custom_call.1} parent=1 // pred_check
      _
    $region23: #{tpu_custom_call.1} parent=1 // pred_check_branch
      %118 = sbr.rel (0) target = $region25
    $region24: #{tpu_custom_call.1} parent=1 // pred_region
      %119 = dma.done [#allocation4], 128
    $region25: #{tpu_custom_call.1} parent=1 // pred_fallthru
      _
    %120 = vsyncpa [#allocation3], 1
    %121 = vsyncpa [#allocation4], 1
    %122 = vsyncpa [#allocation5], 1

</llo_original>
